<compile_context>
chip_gen: v7x
topology: tpu7x:2x2x1
jax: 0.10.0
libtpu: 0.0.40
codegen_flags: <defaults>
</compile_context>

<pallas_src>
import math

import jax
import jax.numpy as jnp
import numpy as np
from jax.experimental import pallas as pl
from jax.experimental.pallas import tpu as pltpu

_LANE = 128


# ---------------------------------------------------------------------------
# Kernels
# ---------------------------------------------------------------------------
def _alpha_blend_kernel(alpha_ref, target_ref, aug_ref, mask_ref, out_ref,
                        src_acc, msk_acc):
    """Grid step (hw_tile, n): accumulate patch n into f32 VMEM scratch."""
    n = pl.program_id(1)

    @pl.when(n == 0)
    def _():
        src_acc[...] = jnp.zeros_like(src_acc)
        msk_acc[...] = jnp.zeros_like(msk_acc)

    a = alpha_ref[n].astype(jnp.float32)      # (BCf, 1), resident in VMEM
    t = target_ref[...].astype(jnp.float32)   # (BCf, T_HW)
    s = aug_ref[0].astype(jnp.float32)        # (BCf, T_HW)
    m = mask_ref[0].astype(jnp.float32)       # (BCf, T_HW)

    # FMA form of (1-a)*t + a*s.  Accumulate into f32 scratch (not out_ref) to
    # avoid a per-patch read-modify-write + astype of the output tile and to
    # keep full accumulation precision even for sub-f32 target dtypes.
    src_acc[...] += (t + a * (s - t)) * m
    msk_acc[...] += m

    @pl.when(n == pl.num_programs(1) - 1)
    def _():
        msum = msk_acc[...]
        nz = msum != 0
        # once-per-tile epilogue; exact reciprocal keeps bit-faithful results
        inv = pl.reciprocal(jnp.where(nz, msum, 1.0), approx=False)
        src = jnp.where(nz, src_acc[...] * inv, src_acc[...])
        binm = (msum > 0).astype(jnp.float32)
        t_f32 = target_ref[...].astype(jnp.float32)
        out_ref[...] = ((1.0 - binm) * t_f32 + src).astype(out_ref.dtype)


def _none_blend_kernel(target_ref, aug_ref, mask_ref, out_ref):
    """'none' method: later patches overwrite earlier ones where mask != 0.

    The output is initialized to target at n == 0, so uncovered positions keep
    the target value (mathematically identical to the torch reference
    (1-binm)*target + source).
    """
    n = pl.program_id(1)

    @pl.when(n == 0)
    def _():
        out_ref[...] = target_ref[...].astype(out_ref.dtype)

    s = aug_ref[0]
    m = mask_ref[0]
    # masks are not guaranteed binary, so keep the s*m product (matches torch)
    val = (s.astype(jnp.float32) * m.astype(jnp.float32)).astype(out_ref.dtype)
    out_ref[...] = jnp.where(m != 0, val, out_ref[...])


# ---------------------------------------------------------------------------
# Wrapper helpers
# ---------------------------------------------------------------------------
def _fold_factor(bc, h, w, dtypes):
    """Fold part of H into the sublane axis so the sublane count matches the
    packing granularity of the narrowest dtype (f32:8, bf16:16, int8/bool:32),
    while keeping the lane (HW) axis at least 128 wide."""
    req = 8
    for dt in dtypes:
        req = max(req, 32 // max(jnp.dtype(dt).itemsize, 1))
    for r in (32, 16, 8):
        if r > req:
            continue
        need = r // math.gcd(bc, r)
        if need == 1:
            return 1
        if h % need == 0 and (h // need) * w >= _LANE:
            return need
    return 1


def _vmem_budget():
    """Generation-aware VMEM sizing: (working-set budget, scoped vmem limit)."""
    try:
        cap = int(pltpu.get_tpu_info().vmem_capacity_bytes)
    except Exception:
        cap = 64 * 1024 * 1024                      # conservative (v7x-sized) fallback
    limit = min((cap * 5) // 8, 96 * 1024 * 1024)   # ~40 MiB on v7x, ~80 MiB on v5e/v6e
    budget = (limit * 3) // 4                       # headroom for pipeline/internal scratch
    return budget, limit


def _row_bytes(dtypes, n_scratch):
    """Bytes per (sublane-row x 1 lane) of the double-buffered working set."""
    return sum(2 * jnp.dtype(dt).itemsize for dt in dtypes) + 4 * n_scratch


def _pick_t_hw(bcf, hw, row_bytes, budget_bytes):
    """Lane-tile size: multiple of 128, sized from actual per-array dtypes so
    the per-step working set stays inside the generation-specific budget."""
    t = budget_bytes // max(bcf * row_bytes, 1)
    t = max((t // _LANE) * _LANE, _LANE)
    if t >= hw:
        if hw >= 2 * _LANE:
            # Whole image fits: split anyway so the "parallel" hw axis can feed
            # both TensorCores on v7x (near-free on single-TC v5e/v6e).
            half = -(-hw // 2)
            t = ((half + _LANE - 1) // _LANE) * _LANE
        else:
            t = hw
    return min(t, hw)


def _run_blend(kernel, arrays, n_patch, bcf, hw, t_hw, out_dtype, has_alpha,
               n_scratch, vmem_limit):
    grid = (pl.cdiv(hw, t_hw), n_patch)   # (lane tiles, patches)

    in_specs = []
    if has_alpha:
        # whole alpha tensor resident in VMEM for the entire grid (tiny).
        in_specs.append(pl.BlockSpec((n_patch, bcf, 1), lambda h, n: (0, 0, 0)))
    in_specs += [
        pl.BlockSpec((bcf, t_hw), lambda h, n: (0, h)),        # target (resident over n)
        pl.BlockSpec((1, bcf, t_hw), lambda h, n: (n, 0, h)),  # aug_source patch n
        pl.BlockSpec((1, bcf, t_hw), lambda h, n: (n, 0, h)),  # mask patch n
    ]
    scratch = [pltpu.VMEM((bcf, t_hw), jnp.float32) for _ in range(n_scratch)]

    return pl.pallas_call(
        kernel,
        out_shape=jax.ShapeDtypeStruct((bcf, hw), out_dtype),
        grid_spec=pltpu.PrefetchScalarGridSpec(
            num_scalar_prefetch=0,
            grid=grid,
            in_specs=in_specs,
            out_specs=pl.BlockSpec((bcf, t_hw), lambda h, n: (0, h)),
            scratch_shapes=scratch,
        ),
        compiler_params=pltpu.CompilerParams(
            # hw tiles are independent (megacore-shardable); N must stay
            # sequential (ordering matters for the 'none' method).
            dimension_semantics=("parallel", "arbitrary"),
            vmem_limit_bytes=vmem_limit,
        ),
    )(*arrays)


def alpha_blending_pallas(target, aug_source, mask, alpha, *, t_hw=None):
    N, B, C, H, W = aug_source.shape
    dtypes = (target.dtype, aug_source.dtype, mask.dtype, target.dtype)
    f = _fold_factor(B * C, H, W, dtypes)
    bcf, hw = B * C * f, (H // f) * W

    budget, vmem_limit = _vmem_budget()
    if t_hw is None:
        t_hw = _pick_t_hw(bcf, hw, _row_bytes(dtypes, n_scratch=2), budget)
    t_hw = min(t_hw, hw)

    # native dtypes all the way into the kernel (no host-side upcast)
    t2 = target.reshape(bcf, hw)
    s2 = aug_source.reshape(N, bcf, hw)
    m2 = mask.reshape(N, bcf, hw)
    a2 = jnp.broadcast_to(alpha.reshape(N, B, 1, 1),
                          (N, B, C, f)).reshape(N, bcf, 1).astype(jnp.float32)

    out = _run_blend(_alpha_blend_kernel, (a2, t2, s2, m2), N, bcf, hw, t_hw,
                     target.dtype, has_alpha=True, n_scratch=2,
                     vmem_limit=vmem_limit)
    return out.reshape(B, C, H, W)


def none_blending_pallas(target, aug_source, mask, *, t_hw=None):
    N, B, C, H, W = aug_source.shape
    dtypes = (target.dtype, aug_source.dtype, mask.dtype, target.dtype)
    f = _fold_factor(B * C, H, W, dtypes)
    bcf, hw = B * C * f, (H // f) * W

    budget, vmem_limit = _vmem_budget()
    if t_hw is None:
        t_hw = _pick_t_hw(bcf, hw, _row_bytes(dtypes, n_scratch=0), budget)
    t_hw = min(t_hw, hw)

    t2 = target.reshape(bcf, hw)
    s2 = aug_source.reshape(N, bcf, hw)
    m2 = mask.reshape(N, bcf, hw)

    out = _run_blend(_none_blend_kernel, (t2, s2, m2), N, bcf, hw, t_hw,
                     target.dtype, has_alpha=False, n_scratch=0,
                     vmem_limit=vmem_limit)
    return out.reshape(B, C, H, W)


class RandomBlender:
    """JAX/Pallas port of the PyTorch RandomBlender module."""

    def __init__(self, params: dict):
        self.params = params
        self.method = params['METHOD']

    def forward(self, target, aug_source, mask, *, rng_key=None):
        if self.method == 'none':
            return none_blending_pallas(target, aug_source, mask)
        elif self.method == 'alpha':
            if rng_key is None:
                rng_key = jax.random.PRNGKey(0)
            n, b = mask.shape[0], mask.shape[1]
            alpha = 0.1 + jax.random.uniform(
                rng_key, (n, b, 1, 1, 1), dtype=jnp.float32) * 0.9
            return alpha_blending_pallas(target, aug_source, mask, alpha)
        elif self.method == 'poisson':
            # TODO(synk): Poisson image editing needs an iterative/FFT Laplacian
            # solve with data-dependent boundaries; no clean Pallas port here.
            raise NotImplementedError("poisson blending not implemented in Pallas")
        else:
            raise KeyError(f'Error. {self.method} is not supported.')

    __call__ = forward


# ---------------------------------------------------------------------------
# Pure-JAX references (for correctness check)
# ---------------------------------------------------------------------------
def _alpha_ref(target, aug_source, mask, alpha):
    src = (((1 - alpha) * target[None] + alpha * aug_source) * mask).sum(0)
    msum = mask.sum(0)
    src = jnp.where(msum != 0, src / jnp.where(msum != 0, msum, 1.0), src)
    binm = (msum > 0).astype(target.dtype)
    return (1 - binm) * target + src


def _none_ref(target, aug_source, mask):
    src = jnp.zeros_like(target)
    for i in range(mask.shape[0]):
        src = jnp.where(mask[i] != 0, aug_source[i] * mask[i], src)
    binm = (mask.sum(0) > 0).astype(target.dtype)
    return (1 - binm) * target + src


# ---------------------------------------------------------------------------
if __name__ == "__main__":
    key = jax.random.PRNGKey(0)
    k_t, k_s, k_m, k_a = jax.random.split(key, 4)

    N, B, C, H, W = 3, 2, 4, 16, 16
    target = jax.random.normal(k_t, (B, C, H, W), dtype=jnp.float32)
    aug_f32 = jax.random.normal(k_s, (N, B, C, H, W), dtype=jnp.float32)
    mask_bool = jax.random.bernoulli(k_m, 0.3, (N, B, C, H, W))
    mask_f32 = mask_bool.astype(jnp.float32)

    # Narrow native dtypes streamed straight into the kernel (primary HBM win).
    aug_bf16 = aug_f32.astype(jnp.bfloat16)
    mask_u8 = mask_bool.astype(jnp.uint8)

    # --- alpha method (module path; bf16 aug + uint8 mask fed natively) ---
    blender_alpha = RandomBlender({'METHOD': 'alpha'})
    out_alpha = blender_alpha(target, aug_bf16, mask_u8, rng_key=k_a)
    jax.block_until_ready(out_alpha)

    alpha = 0.1 + jax.random.uniform(k_a, (N, B, 1, 1, 1), dtype=jnp.float32) * 0.9
    ref_alpha_narrow = _alpha_ref(target, aug_bf16.astype(jnp.float32),
                                  mask_f32, alpha)
    np.testing.assert_allclose(np.asarray(out_alpha), np.asarray(ref_alpha_narrow),
                               rtol=1e-5, atol=1e-5)

    # --- alpha method, all-f32 path (exercises f32 fold / larger lane tiles) ---
    out_alpha_f32 = alpha_blending_pallas(target, aug_f32, mask_f32, alpha)
    jax.block_until_ready(out_alpha_f32)
    ref_alpha = _alpha_ref(target, aug_f32, mask_f32, alpha)
    np.testing.assert_allclose(np.asarray(out_alpha_f32), np.asarray(ref_alpha),
                               rtol=1e-5, atol=1e-5)

    # --- exercise an explicitly lane-tiled grid path ---
    out_alpha_tiled = alpha_blending_pallas(target, aug_f32, mask_f32, alpha,
                                            t_hw=128)
    jax.block_until_ready(out_alpha_tiled)
    np.testing.assert_allclose(np.asarray(out_alpha_tiled),
                               np.asarray(ref_alpha), rtol=1e-5, atol=1e-5)

    # --- none method, f32 ---
    blender_none = RandomBlender({'METHOD': 'none'})
    out_none = blender_none(target, aug_f32, mask_f32)
    jax.block_until_ready(out_none)
    ref_none = _none_ref(target, aug_f32, mask_f32)
    np.testing.assert_allclose(np.asarray(out_none), np.asarray(ref_none),
                               rtol=1e-5, atol=1e-5)

    # --- none method, native narrow dtypes (bf16 source, uint8 mask) ---
    out_none_narrow = none_blending_pallas(target, aug_bf16, mask_u8)
    jax.block_until_ready(out_none_narrow)
    ref_none_narrow = _none_ref(target, aug_bf16.astype(jnp.float32), mask_f32)
    np.testing.assert_allclose(np.asarray(out_none_narrow),
                               np.asarray(ref_none_narrow),
                               rtol=1e-5, atol=1e-5)

    print("KERNEL_OK")
</pallas_src>

<mosaic_0001>
module attributes {stable_mosaic.version = 11 : i64} {
  func.func @_alpha_blend_kernel(%arg0: i32, %arg1: i32, %arg2: memref<3x16x1xf32, #tpu.memory_space<vmem>>, %arg3: memref<16x128xf32, #tpu.memory_space<vmem>>, %arg4: memref<1x16x128xbf16, #tpu.memory_space<vmem>>, %arg5: memref<1x16x128xi8, #tpu.memory_space<vmem>>, %arg6: memref<16x128xf32, #tpu.memory_space<vmem>>, %arg7: memref<16x128xf32, #tpu.memory_space<vmem>>, %arg8: memref<16x128xf32, #tpu.memory_space<vmem>>) attributes {dimension_semantics = [#tpu.dimension_semantics<parallel>, #tpu.dimension_semantics<arbitrary>], iteration_bounds = array<i64: 1, 3>, scalar_prefetch = 0 : i64, scratch_operands = 2 : i64, tpu.core_type = #tpu.core_type<tc>, window_params = [{pipeline_mode = #tpu.pipeline_mode<synchronous>, transform_indices = @transform_0, window_bounds = array<i64: 3, 16, 1>}, {transform_indices = @transform_1, window_bounds = array<i64: 16, 128>}, {transform_indices = @transform_2, window_bounds = array<i64: 1, 16, 128>}, {transform_indices = @transform_3, window_bounds = array<i64: 1, 16, 128>}, {transform_indices = @transform_4, window_bounds = array<i64: 16, 128>}]} {
    %c0_i32 = arith.constant 0 : i32
    %0 = arith.cmpi eq, %arg1, %c0_i32 : i32
    %1 = arith.extui %0 : i1 to i32
    %c0_i32_0 = arith.constant 0 : i32
    %2 = arith.cmpi ne, %1, %c0_i32_0 : i32
    scf.if %2 {
      %cst = arith.constant 0.000000e+00 : f32
      %27 = vector.broadcast %cst : f32 to vector<16x128xf32>
      %c0_19 = arith.constant 0 : index
      %c0_20 = arith.constant 0 : index
      %28 = vector.load %arg7[%c0_19, %c0_20] : memref<16x128xf32, #tpu.memory_space<vmem>>, vector<16x128xf32>
      tpu.vector_store %arg7[%c0_19, %c0_20], %27 {strides = array<i32>} : memref<16x128xf32, #tpu.memory_space<vmem>>, vector<16x128xf32>,
      %cst_21 = arith.constant 0.000000e+00 : f32
      %29 = vector.broadcast %cst_21 : f32 to vector<16x128xf32>
      %c0_22 = arith.constant 0 : index
      %c0_23 = arith.constant 0 : index
      %30 = vector.load %arg8[%c0_22, %c0_23] : memref<16x128xf32, #tpu.memory_space<vmem>>, vector<16x128xf32>
      tpu.vector_store %arg8[%c0_22, %c0_23], %29 {strides = array<i32>} : memref<16x128xf32, #tpu.memory_space<vmem>>, vector<16x128xf32>,
    } else {
    }
    %3 = arith.index_cast %arg1 : i32 to index
    %c0 = arith.constant 0 : index
    %c0_1 = arith.constant 0 : index
    %4 = vector.load %arg2[%3, %c0, %c0_1] : memref<3x16x1xf32, #tpu.memory_space<vmem>>, vector<1x16x1xf32>
    %5 = vector.shape_cast %4 : vector<1x16x1xf32> to vector<16x1xf32>
    %c0_2 = arith.constant 0 : index
    %c0_3 = arith.constant 0 : index
    %6 = vector.load %arg3[%c0_2, %c0_3] : memref<16x128xf32, #tpu.memory_space<vmem>>, vector<16x128xf32>
    %c0_4 = arith.constant 0 : index
    %c0_5 = arith.constant 0 : index
    %c0_6 = arith.constant 0 : index
    %7 = vector.load %arg4[%c0_4, %c0_5, %c0_6] : memref<1x16x128xbf16, #tpu.memory_space<vmem>>, vector<1x16x128xbf16>
    %8 = vector.shape_cast %7 : vector<1x16x128xbf16> to vector<16x128xbf16>
    %9 = arith.extf %8 : vector<16x128xbf16> to vector<16x128xf32>
    %c0_7 = arith.constant 0 : index
    %c0_8 = arith.constant 0 : index
    %c0_9 = arith.constant 0 : index
    %10 = vector.load %arg5[%c0_7, %c0_8, %c0_9] : memref<1x16x128xi8, #tpu.memory_space<vmem>>, vector<1x16x128xi8>
    %11 = vector.shape_cast %10 : vector<1x16x128xi8> to vector<16x128xi8>
    %12 = arith.uitofp %11 : vector<16x128xi8> to vector<16x128xf32>
    %c0_10 = arith.constant 0 : index
    %c0_11 = arith.constant 0 : index
    %13 = vector.load %arg7[%c0_10, %c0_11] : memref<16x128xf32, #tpu.memory_space<vmem>>, vector<16x128xf32>
    %14 = arith.subf %9, %6 : vector<16x128xf32>
    %15 = vector.broadcast %5 : vector<16x1xf32> to vector<16x128xf32>
    %16 = arith.mulf %15, %14 : vector<16x128xf32>
    %17 = arith.addf %6, %16 : vector<16x128xf32>
    %18 = arith.mulf %17, %12 : vector<16x128xf32>
    %19 = arith.addf %13, %18 : vector<16x128xf32>
    %c0_12 = arith.constant 0 : index
    %c0_13 = arith.constant 0 : index
    %20 = vector.load %arg7[%c0_12, %c0_13] : memref<16x128xf32, #tpu.memory_space<vmem>>, vector<16x128xf32>
    tpu.vector_store %arg7[%c0_12, %c0_13], %19 {strides = array<i32>} : memref<16x128xf32, #tpu.memory_space<vmem>>, vector<16x128xf32>,
    %c0_14 = arith.constant 0 : index
    %c0_15 = arith.constant 0 : index
    %21 = vector.load %arg8[%c0_14, %c0_15] : memref<16x128xf32, #tpu.memory_space<vmem>>, vector<16x128xf32>
    %22 = arith.addf %21, %12 : vector<16x128xf32>
    %c0_16 = arith.constant 0 : index
    %c0_17 = arith.constant 0 : index
    %23 = vector.load %arg8[%c0_16, %c0_17] : memref<16x128xf32, #tpu.memory_space<vmem>>, vector<16x128xf32>
    tpu.vector_store %arg8[%c0_16, %c0_17], %22 {strides = array<i32>} : memref<16x128xf32, #tpu.memory_space<vmem>>, vector<16x128xf32>,
    %c2_i32 = arith.constant 2 : i32
    %24 = arith.cmpi eq, %arg1, %c2_i32 : i32
    %25 = arith.extui %24 : i1 to i32
    %c0_i32_18 = arith.constant 0 : i32
    %26 = arith.cmpi ne, %25, %c0_i32_18 : i32
    scf.if %26 {
      %c0_19 = arith.constant 0 : index
      %c0_20 = arith.constant 0 : index
      %27 = vector.load %arg8[%c0_19, %c0_20] : memref<16x128xf32, #tpu.memory_space<vmem>>, vector<16x128xf32>
      %cst = arith.constant 0.000000e+00 : f32
      %28 = vector.broadcast %cst : f32 to vector<16x128xf32>
      %29 = arith.cmpf one, %27, %28 : vector<16x128xf32>
      %cst_21 = arith.constant 1.000000e+00 : f32
      %30 = vector.broadcast %cst_21 : f32 to vector<16x128xf32>
      %31 = arith.select %29, %27, %30 : vector<16x128xi1>, vector<16x128xf32>
      %32 = tpu.reciprocal %31 : vector<16x128xf32> -> vector<16x128xf32>
      %c0_22 = arith.constant 0 : index
      %c0_23 = arith.constant 0 : index
      %33 = vector.load %arg7[%c0_22, %c0_23] : memref<16x128xf32, #tpu.memory_space<vmem>>, vector<16x128xf32>
      %34 = arith.mulf %33, %32 : vector<16x128xf32>
      %c0_24 = arith.constant 0 : index
      %c0_25 = arith.constant 0 : index
      %35 = vector.load %arg7[%c0_24, %c0_25] : memref<16x128xf32, #tpu.memory_space<vmem>>, vector<16x128xf32>
      %36 = arith.select %29, %34, %35 : vector<16x128xi1>, vector<16x128xf32>
      %cst_26 = arith.constant 0.000000e+00 : f32
      %37 = vector.broadcast %cst_26 : f32 to vector<16x128xf32>
      %38 = arith.cmpf ogt, %27, %37 : vector<16x128xf32>
      %39 = arith.extui %38 : vector<16x128xi1> to vector<16x128xi32>
      %40 = arith.sitofp %39 : vector<16x128xi32> to vector<16x128xf32>
      %c0_27 = arith.constant 0 : index
      %c0_28 = arith.constant 0 : index
      %41 = vector.load %arg3[%c0_27, %c0_28] : memref<16x128xf32, #tpu.memory_space<vmem>>, vector<16x128xf32>
      %cst_29 = arith.constant 1.000000e+00 : f32
      %42 = vector.broadcast %cst_29 : f32 to vector<16x128xf32>
      %43 = arith.subf %42, %40 : vector<16x128xf32>
      %44 = arith.mulf %43, %41 : vector<16x128xf32>
      %45 = arith.addf %44, %36 : vector<16x128xf32>
      %c0_30 = arith.constant 0 : index
      %c0_31 = arith.constant 0 : index
      %46 = vector.load %arg6[%c0_30, %c0_31] : memref<16x128xf32, #tpu.memory_space<vmem>>, vector<16x128xf32>
      tpu.vector_store %arg6[%c0_30, %c0_31], %45 {strides = array<i32>} : memref<16x128xf32, #tpu.memory_space<vmem>>, vector<16x128xf32>,
    } else {
    }
    return
  }
  func.func @transform_0(%arg0: i32, %arg1: i32) -> (i32, i32, i32) {
    %c0_i32 = arith.constant 0 : i32
    %c0_i32_0 = arith.constant 0 : i32
    %c0_i32_1 = arith.constant 0 : i32
    %c0_i32_2 = arith.constant 0 : i32
    return %c0_i32, %c0_i32_0, %c0_i32_1 : i32, i32, i32
  }
  func.func @transform_1(%arg0: i32, %arg1: i32) -> (i32, i32) {
    %c0_i32 = arith.constant 0 : i32
    %c0_i32_0 = arith.constant 0 : i32
    return %c0_i32, %arg0 : i32, i32
  }
  func.func @transform_2(%arg0: i32, %arg1: i32) -> (i32, i32, i32) {
    %c0_i32 = arith.constant 0 : i32
    %c0_i32_0 = arith.constant 0 : i32
    return %arg1, %c0_i32, %arg0 : i32, i32, i32
  }
  func.func @transform_3(%arg0: i32, %arg1: i32) -> (i32, i32, i32) {
    %c0_i32 = arith.constant 0 : i32
    %c0_i32_0 = arith.constant 0 : i32
    return %arg1, %c0_i32, %arg0 : i32, i32, i32
  }
  func.func @transform_4(%arg0: i32, %arg1: i32) -> (i32, i32) {
    %c0_i32 = arith.constant 0 : i32
    %c0_i32_0 = arith.constant 0 : i32
    return %c0_i32, %arg0 : i32, i32
  }
}

</mosaic_0001>

<llo_original>
// kernel: tpu_custom_call.1
$region0: #{tpu_custom_call.1}
  #allocation0 [shape = 'u32[]', space=smem, size = 0x4, offset = 0x4, fixed_abs, tag = 'smem constant byte address 0x4 - core index']
  #allocation1 [shape = 'u32[144,128]{1,0:T(1,128)}', space=vmem, size = 0x12000, scoped, tag = 'internal scratch']
  #allocation2 [shape = 'f32[16,128]{1,0:T(8,128)}', space=vmem, size = 0x2000, scoped, tag = 'scratch operand']
  #allocation3 [shape = 'f32[16,128]{1,0:T(8,128)}', space=vmem, size = 0x2000, scoped, tag = 'scratch operand']
  %s0 = inlined_call_operand.vmem [shape: f32[3,16,1], index: 0, kind: input, shape index: {}]
  %s1 = inlined_call_operand.vmem [shape: f32[16,128], index: 1, kind: input, shape index: {}]
  %s2 = inlined_call_operand.vmem [shape: bf16[3,16,128], index: 2, kind: input, shape index: {}]
  %s3 = inlined_call_operand.vmem [shape: u8[3,16,128], index: 3, kind: input, shape index: {}]
  %s4 = inlined_call_operand.hbm [shape: f32[16,128], index: 4, kind: output, shape index: {}]
  %s5 = sld [smem:[#allocation0]]
  $region57: #{tpu_custom_call.1} parent=0
    _
  %s7 = ssub.s32 1, %s5
  %s8 = scalar_select 0, %s7, %s5
  $region1: #{tpu_custom_call.1} parent=0
    #allocation4 [shape = 'u8[8192]{0}', space=vmem, size = 0x2000, scoped, tag = 'output window, operand 0, single buffered']
    #allocation5 [shape = 's32[2]{0}', space=sflag, size = 0x8, scoped, tag = 'scoped memory for tpu_custom_call.1']
    %9 = vsyncpa [#allocation5], 0
    loop: start=0, step=1, limit=5
    $region2: #{tpu_custom_call.1} parent=1 // loop_pre_header
      _
    $region3: #{tpu_custom_call.1} parent=1 // loop_header
      %s11 = sphi 0, %s15
      %p12 = scmp.ge.s32.totalorder %s11, 5
      %s18 = sphi 0, %s30
      %s19 = sphi 0, %s26
      %s20 = sphi 0, %s18
      %s21 = sphi 0, %s19
      %s22 = sphi 0, %s20
      %s23 = sphi 0, %s21
      %s31 = sphi 0, %s31
      %s33 = sphi 0, %s31
      %s34 = sphi 0, %s33
      %s48 = sphi 0, %s34
      %s54 = sphi 0, %s56
      %s57 = sphi 0, %s54
      %s58 = sphi 0, %s57
      %s74 = sphi 0, %s58
      %s82 = sphi 0, %s84
      %s85 = sphi 0, %s82
      %s86 = sphi 0, %s85
      %s102 = sphi 0, %s86
      %s110 = sphi 0, %s112
      %s113 = sphi 0, %s110
      %s114 = sphi 0, %s113
      %s130 = sphi 0, %s114
      %s136 = sphi 0, %s138
      %s139 = sphi 0, %s136
      %s140 = sphi 0, %s139
      %s156 = sphi 0, %s140
    $region4: #{tpu_custom_call.1} parent=1 // loop_header_branch
      %14 = sbr.rel (%p12) target = $region8
    $region5: #{tpu_custom_call.1} parent=1 // loop_body
      %s16 = ssub.s32 %s11, 1
      %s17 = ssub.s32 %s11, 2
      %s24 = sadd.s32 1, %s19
      %p25 = scmp.ge.s32.totalorder %s24, 3
      %s26 = scalar_select %p25, 0, %s24
      %s27 = sadd.s32 1, %s18
      %s28 = scalar_select %p25, %s27, %s18
      %p29 = scmp.ge.s32.totalorder %s28, 1
      %s30 = scalar_select %p29, 0, %s28
      %s32 = sadd.s32 %s31, 1
      %p35 = scmp.eq.s32.totalorder %s11, 2
      %p36 = scmp.ne.s32.totalorder %s31, %s33
      %p37 = scmp.eq.s32.totalorder %s11, 0
      %p38 = por %p36, %p37
      %p39 = scmp.ne.s32.totalorder %s31, %s33
      %p40 = scmp.eq.s32.totalorder %s16, 2
      %p41 = por %p39, %p40
      %p42 = scmp.ne.s32.totalorder %s33, %s34
      %p43 = scmp.eq.s32.totalorder %s16, 0
      %p44 = por %p42, %p43
      %p45 = scmp.ne.s32.totalorder %s33, %s34
      %p46 = scmp.eq.s32.totalorder %s17, 2
      %p47 = por %p45, %p46
      %p49 = scmp.ne.s32.totalorder %s34, %s48
      %p50 = scmp.eq.s32.totalorder %s17, 0
      %p51 = por %p49, %p50
      %s52 = ssub.s32 %s18, %s30
      %p53 = scmp.eq.s32.totalorder %s52, 0
      %s55 = sadd.s32 %s54, 1
      %s56 = scalar_select %p53, %s54, %s55
      %p59 = pneg %p53
      %p60 = scmp.eq.s32.totalorder %s11, 2
      %p61 = por %p59, %p60
      %p62 = scmp.ne.s32.totalorder %s54, %s57
      %p63 = scmp.eq.s32.totalorder %s11, 0
      %p64 = por %p62, %p63
      %p65 = scmp.ne.s32.totalorder %s54, %s57
      %p66 = scmp.eq.s32.totalorder %s16, 2
      %p67 = por %p65, %p66
      %p68 = scmp.ne.s32.totalorder %s57, %s58
      %p69 = scmp.eq.s32.totalorder %s16, 0
      %p70 = por %p68, %p69
      %p71 = scmp.ne.s32.totalorder %s57, %s58
      %p72 = scmp.eq.s32.totalorder %s17, 2
      %p73 = por %p71, %p72
      %p75 = scmp.ne.s32.totalorder %s58, %s74
      %p76 = scmp.eq.s32.totalorder %s17, 0
      %p77 = por %p75, %p76
      %s78 = ssub.s32 %s19, %s26
      %s79 = ssub.s32 %s18, %s30
      %s80 = sor.u32 %s78, %s79
      %p81 = scmp.eq.s32.totalorder %s80, 0
      %s83 = sadd.s32 %s82, 1
      %s84 = scalar_select %p81, %s82, %s83
      %p87 = pneg %p81
      %p88 = scmp.eq.s32.totalorder %s11, 2
      %p89 = por %p87, %p88
      %p90 = scmp.ne.s32.totalorder %s82, %s85
      %p91 = scmp.eq.s32.totalorder %s11, 0
      %p92 = por %p90, %p91
      %p93 = scmp.ne.s32.totalorder %s82, %s85
      %p94 = scmp.eq.s32.totalorder %s16, 2
      %p95 = por %p93, %p94
      %p96 = scmp.ne.s32.totalorder %s85, %s86
      %p97 = scmp.eq.s32.totalorder %s16, 0
      %p98 = por %p96, %p97
      %p99 = scmp.ne.s32.totalorder %s85, %s86
      %p100 = scmp.eq.s32.totalorder %s17, 2
      %p101 = por %p99, %p100
      %p103 = scmp.ne.s32.totalorder %s86, %s102
      %p104 = scmp.eq.s32.totalorder %s17, 0
      %p105 = por %p103, %p104
      %s106 = ssub.s32 %s19, %s26
      %s107 = ssub.s32 %s18, %s30
      %s108 = sor.u32 %s106, %s107
      %p109 = scmp.eq.s32.totalorder %s108, 0
      %s111 = sadd.s32 %s110, 1
      %s112 = scalar_select %p109, %s110, %s111
      %p115 = pneg %p109
      %p116 = scmp.eq.s32.totalorder %s11, 2
      %p117 = por %p115, %p116
      %p118 = scmp.ne.s32.totalorder %s110, %s113
      %p119 = scmp.eq.s32.totalorder %s11, 0
      %p120 = por %p118, %p119
      %p121 = scmp.ne.s32.totalorder %s110, %s113
      %p122 = scmp.eq.s32.totalorder %s16, 2
      %p123 = por %p121, %p122
      %p124 = scmp.ne.s32.totalorder %s113, %s114
      %p125 = scmp.eq.s32.totalorder %s16, 0
      %p126 = por %p124, %p125
      %p127 = scmp.ne.s32.totalorder %s113, %s114
      %p128 = scmp.eq.s32.totalorder %s17, 2
      %p129 = por %p127, %p128
      %p131 = scmp.ne.s32.totalorder %s114, %s130
      %p132 = scmp.eq.s32.totalorder %s17, 0
      %p133 = por %p131, %p132
      %s134 = ssub.s32 %s18, %s30
      %p135 = scmp.eq.s32.totalorder %s134, 0
      %s137 = sadd.s32 %s136, 1
      %s138 = scalar_select %p135, %s136, %s137
      %p141 = pneg %p135
      %p142 = scmp.eq.s32.totalorder %s11, 2
      %p143 = por %p141, %p142
      %p144 = scmp.ne.s32.totalorder %s136, %s139
      %p145 = scmp.eq.s32.totalorder %s11, 0
      %p146 = por %p144, %p145
      %p147 = scmp.ne.s32.totalorder %s136, %s139
      %p148 = scmp.eq.s32.totalorder %s16, 2
      %p149 = por %p147, %p148
      %p150 = scmp.ne.s32.totalorder %s139, %s140
      %p151 = scmp.eq.s32.totalorder %s16, 0
      %p152 = por %p150, %p151
      %p153 = scmp.ne.s32.totalorder %s139, %s140
      %p154 = scmp.eq.s32.totalorder %s17, 2
      %p155 = por %p153, %p154
      %p157 = scmp.ne.s32.totalorder %s140, %s156
      %p158 = scmp.eq.s32.totalorder %s17, 0
      %p159 = por %p157, %p158
      %p160 = scmp.le.s32.totalorder 1, %s11
      %p161 = scmp.lt.s32.totalorder %s11, 4
      %p162 = pnand %p160, %p161
      %p163 = pneg %p162
      // Predicated region
      $region9: #{tpu_custom_call.1} parent=5 // pred_check
        _
      $region10: #{tpu_custom_call.1} parent=5 // pred_check_branch
        %165 = sbr.rel (%p162) target = $region12
      $region11: #{tpu_custom_call.1} parent=5 // pred_region
        %s166 = ssub.s32 %s11, 1
        // Predicated region
        $region13: #{tpu_custom_call.1} parent=11 // pred_check
          %p167 = pneg %p44
        $region14: #{tpu_custom_call.1} parent=11 // pred_check_branch
          %169 = sbr.rel (%p167) target = $region16
        $region15: #{tpu_custom_call.1} parent=11 // pred_region
          _
        $region16: #{tpu_custom_call.1} parent=11 // pred_fallthru
          _
        // Predicated region
        $region17: #{tpu_custom_call.1} parent=11 // pred_check
          %p170 = pneg %p70
        $region18: #{tpu_custom_call.1} parent=11 // pred_check_branch
          %172 = sbr.rel (%p170) target = $region20
        $region19: #{tpu_custom_call.1} parent=11 // pred_region
          %p173 = scmp.lt.s32.totalorder %s20, 0
          %s174 = scalar_select %p173, %s20, 0
          %s175 = smul.addr %s174, 8
          %s176 = scalar_lea.vmem %s1, %s175
        $region20: #{tpu_custom_call.1} parent=11 // pred_fallthru
          _
      $region12: #{tpu_custom_call.1} parent=5 // pred_fallthru
        _
      %p177 = scmp.lt.s32.totalorder %s11, 3
      // Predicated region
      $region21: #{tpu_custom_call.1} parent=5 // pred_check
        %p178 = pneg %p177
      $region22: #{tpu_custom_call.1} parent=5 // pred_check_branch
        %180 = sbr.rel (%p178) target = $region24
      $region23: #{tpu_custom_call.1} parent=5 // pred_region
        // Predicated region
        $region25: #{tpu_custom_call.1} parent=23 // pred_check
          %p181 = pneg %p92
        $region26: #{tpu_custom_call.1} parent=23 // pred_check_branch
          %183 = sbr.rel (%p181) target = $region28
        $region27: #{tpu_custom_call.1} parent=23 // pred_region
          %p184 = scmp.lt.s32.totalorder %s19, 2
          %s185 = scalar_select %p184, %s19, 2
          %p186 = scmp.lt.s32.totalorder %s18, 0
          %s187 = scalar_select %p186, %s18, 0
          %s188 = smul.addr %s185, 2
          %s189 = sadd.s32 %s187, %s188
          %s190 = smul.addr %s189, 4
          %s191 = scalar_lea.vmem %s2, %s190
        $region28: #{tpu_custom_call.1} parent=23 // pred_fallthru
          _
        // Predicated region
        $region29: #{tpu_custom_call.1} parent=23 // pred_check
          %p192 = pneg %p120
        $region30: #{tpu_custom_call.1} parent=23 // pred_check_branch
          %194 = sbr.rel (%p192) target = $region32
        $region31: #{tpu_custom_call.1} parent=23 // pred_region
          %p195 = scmp.lt.s32.totalorder %s19, 2
          %s196 = scalar_select %p195, %s19, 2
          %p197 = scmp.lt.s32.totalorder %s18, 0
          %s198 = scalar_select %p197, %s18, 0
          %s199 = smul.addr %s196, 2
          %s200 = sadd.s32 %s198, %s199
          %s201 = smul.addr %s200, 2
          %s202 = scalar_lea.vmem %s3, %s201
        $region32: #{tpu_custom_call.1} parent=23 // pred_fallthru
          _
      $region24: #{tpu_custom_call.1} parent=5 // pred_fallthru
        _
      %p203 = scmp.le.s32.totalorder 1, %s11
      %p204 = scmp.lt.s32.totalorder %s11, 4
      %p205 = pnand %p203, %p204
      %p206 = pneg %p205
      // Predicated region
      $region33: #{tpu_custom_call.1} parent=5 // pred_check
        _
      $region34: #{tpu_custom_call.1} parent=5 // pred_check_branch
        %208 = sbr.rel (%p205) target = $region36
      $region35: #{tpu_custom_call.1} parent=5 // pred_region
        %s209 = ssub.s32 %s11, 1
        %p210 = pneg %p44
        %p211 = pneg %p41
        %p212 = scmp.lt.s32.totalorder %s20, 0
        %s213 = scalar_select %p212, %s20, 0
        %s214 = smul.addr %s213, 8
        %s215 = scalar_lea.vmem %s1, %s214
        %p216 = pneg %p70
        %p217 = pneg %p67
        %p218 = scmp.lt.s32.totalorder %s21, 2
        %s219 = scalar_select %p218, %s21, 2
        %p220 = scmp.lt.s32.totalorder %s20, 0
        %s221 = scalar_select %p220, %s20, 0
        %s222 = smul.addr %s219, 2
        %s223 = sadd.s32 %s221, %s222
        %s224 = smul.addr %s223, 4
        %s225 = scalar_lea.vmem %s2, %s224
        %p226 = pneg %p98
        %p227 = pneg %p95
        %p228 = scmp.lt.s32.totalorder %s21, 2
        %s229 = scalar_select %p228, %s21, 2
        %p230 = scmp.lt.s32.totalorder %s20, 0
        %s231 = scalar_select %p230, %s20, 0
        %s232 = smul.addr %s229, 2
        %s233 = sadd.s32 %s231, %s232
        %s234 = smul.addr %s233, 2
        %s235 = scalar_lea.vmem %s3, %s234
        %p236 = pneg %p126
        %p237 = pneg %p123
        %p238 = pneg %p152
        %p239 = pneg %p149
        %p240 = scmp.lt.s32.totalorder %s20, 0
        %s241 = scalar_select %p240, %s20, 0
        %s242 = smul.addr %s241, 8
        %s243 = scalar_lea.vmem %s1, %s242
        %p244 = scmp.lt.s32.totalorder %s21, 2
        %s245 = scalar_select %p244, %s21, 2
        %p246 = scmp.lt.s32.totalorder %s20, 0
        %s247 = scalar_select %p246, %s20, 0
        %s248 = smul.addr %s245, 2
        %s249 = sadd.s32 %s247, %s248
        %s250 = smul.addr %s249, 4
        %s251 = scalar_lea.vmem %s2, %s250
        %p252 = scmp.lt.s32.totalorder %s21, 2
        %s253 = scalar_select %p252, %s21, 2
        %p254 = scmp.lt.s32.totalorder %s20, 0
        %s255 = scalar_select %p254, %s20, 0
        %s256 = smul.addr %s253, 2
        %s257 = sadd.s32 %s255, %s256
        %s258 = smul.addr %s257, 2
        %s259 = scalar_lea.vmem %s3, %s258
        %p260 = scmp.eq.s32.totalorder %s21, 0
        // Predicated region
        $region37: #{tpu_custom_call.1} parent=35 // pred_check
          %p261 = pneg %p260
        $region38: #{tpu_custom_call.1} parent=35 // pred_check_branch
          %263 = sbr.rel (%p261) target = $region40
        $region39: #{tpu_custom_call.1} parent=35 // pred_region
          %264 = vst [vmem:[#allocation2] sm:$0xff] 0.0
          %265 = vst [vmem:[#allocation2 + $0x8] sm:$0xff] 0.0
          %266 = vst [vmem:[#allocation3] sm:$0xff] 0.0
          %267 = vst [vmem:[#allocation3 + $0x8] sm:$0xff] 0.0
        $region40: #{tpu_custom_call.1} parent=35 // pred_fallthru
          _
        %s268 = smul.u32 %s21, 16
        %s269 = scalar_lea.vmem %s0, %s268
        %v270 = vld [vmem:[%s269] sm:$0xff]
        %v271 = vld [vmem:[%s269 + $0x8] sm:$0xff]
        %v272 = vld [vmem:[%s243] sm:$0xff]
        %v273 = vld [vmem:[%s243 + $0x8] sm:$0xff]
        %v274 = vld [vmem:[%s251] sm:$0xf]
        %v275 = vld [vmem:[%s251 + $0x4] sm:$0xf]
        %v276 = vunpack.c.l.bf16 %v274
        %v277 = vunpack.c.l.bf16 %v275
        %v278 = vld [vmem:[%s259] sm:$0x3]
        %v279 = vld [vmem:[%s259 + $0x2] sm:$0x3]
        %v280 = vunpack.c.0.s8 %v278
        %v281 = vunpack.c.0.s8 %v279
        %v282 = vand.u32 %v280, 255
        %v283 = vand.u32 %v281, 255
        %v284 = vcvt.s32.f32 %v282
        %v285 = vcvt.s32.f32 %v283
        %v286 = vld [vmem:[#allocation2] sm:$0xff]
        %v287 = vld [vmem:[#allocation2 + $0x8] sm:$0xff]
        %v288 = vsub.f32 %v276, %v272
        %v289 = vsub.f32 %v277, %v273
        %291 = vset.pattern.permute.xlu0 0
        %292 = vperm.xlu0 %291, %v270
        %v293 = vpop.permute.xlu0 %292
        %296 = vset.pattern.permute.xlu0 0
        %297 = vperm.xlu0 %296, %v271
        %v298 = vpop.permute.xlu0 %297
        %v300 = vmul.f32 %v293, %v288
        %v301 = vmul.f32 %v298, %v289
        %v302 = vadd.f32 %v272, %v300
        %v303 = vadd.f32 %v273, %v301
        %v304 = vmul.f32 %v302, %v284
        %v305 = vmul.f32 %v303, %v285
        %v306 = vadd.f32 %v286, %v304
        %v307 = vadd.f32 %v287, %v305
        %308 = vst [vmem:[#allocation2] sm:$0xff] %v306
        %309 = vst [vmem:[#allocation2 + $0x8] sm:$0xff] %v307
        %v310 = vld [vmem:[#allocation3] sm:$0xff]
        %v311 = vld [vmem:[#allocation3 + $0x8] sm:$0xff]
        %v312 = vadd.f32 %v310, %v284
        %v313 = vadd.f32 %v311, %v285
        %314 = vst [vmem:[#allocation3] sm:$0xff] %v312
        %315 = vst [vmem:[#allocation3 + $0x8] sm:$0xff] %v313
        %p316 = scmp.eq.s32.totalorder %s21, 2
        // Predicated region
        $region41: #{tpu_custom_call.1} parent=35 // pred_check
          %p317 = pneg %p316
        $region42: #{tpu_custom_call.1} parent=35 // pred_check_branch
          %319 = sbr.rel (%p317) target = $region44
        $region43: #{tpu_custom_call.1} parent=35 // pred_region
          %v320 = vld [vmem:[#allocation3] sm:$0xff]
          %v321 = vld [vmem:[#allocation3 + $0x8] sm:$0xff]
          %vm322 = vcmp.ne.f32.partialorder %v320, 0.0
          %vm323 = vcmp.ne.f32.partialorder %v321, 0.0
          %v324 = vsel %vm322, %v320, 1.0
          %v325 = vsel %vm323, %v321, 1.0
          %v326 = vrcp.pop %v324
          %v327 = vrcp.pop %v325
          %v328 = vld [vmem:[#allocation2] sm:$0xff]
          %v329 = vld [vmem:[#allocation2 + $0x8] sm:$0xff]
          %v330 = vmul.f32 %v328, %v326
          %v331 = vmul.f32 %v329, %v327
          %v332 = vsel %vm322, %v330, %v328
          %v333 = vsel %vm323, %v331, %v329
          %vm334 = vcmp.gt.f32.partialorder %v320, 0.0
          %vm335 = vcmp.gt.f32.partialorder %v321, 0.0
          %v336 = vsel %vm334, 1, 0
          %v337 = vsel %vm335, 1, 0
          %v338 = vcvt.s32.f32 %v336
          %v339 = vcvt.s32.f32 %v337
          %v340 = vld [vmem:[%s243] sm:$0xff]
          %v341 = vld [vmem:[%s243 + $0x8] sm:$0xff]
          %v342 = vsub.f32 1.0, %v338
          %v343 = vsub.f32 1.0, %v339
          %v344 = vmul.f32 %v342, %v340
          %v345 = vmul.f32 %v343, %v341
          %v346 = vadd.f32 %v344, %v332
          %v347 = vadd.f32 %v345, %v333
          %348 = vst [vmem:[#allocation4] sm:$0xff] %v346
          %349 = vst [vmem:[#allocation4 + $0x8] sm:$0xff] %v347
        $region44: #{tpu_custom_call.1} parent=35 // pred_fallthru
          _
        // Predicated region
        $region45: #{tpu_custom_call.1} parent=35 // pred_check
          %p350 = pneg %p149
        $region46: #{tpu_custom_call.1} parent=35 // pred_check_branch
          %352 = sbr.rel (%p350) target = $region48
        $region47: #{tpu_custom_call.1} parent=35 // pred_region
          %s354 = ssub.s32 256, 256
          %355 = vsyncadd [#allocation5], %s354
          %s356 = smul.addr %s20, 128
          %s357 = scalar_lea.hbm %s4, %s356
          %s358 = sshll.u32 [#allocation4], 4
          %s359 = int_to_ptr.vmem [resolvable:$true] %s358
          %364 = dma.vmem_to_hbm [thread:$0]  %s359, 256, %s357, [#allocation5], 128, 128, 8
        $region48: #{tpu_custom_call.1} parent=35 // pred_fallthru
          _
        // Predicated region
        $region49: #{tpu_custom_call.1} parent=35 // pred_check
          %p365 = pneg %p149
        $region50: #{tpu_custom_call.1} parent=35 // pred_check_branch
          %367 = sbr.rel (%p365) target = $region52
        $region51: #{tpu_custom_call.1} parent=35 // pred_region
          %368 = dma.done [#allocation5], 256
        $region52: #{tpu_custom_call.1} parent=35 // pred_fallthru
          _
      $region36: #{tpu_custom_call.1} parent=5 // pred_fallthru
        _
      %p369 = scmp.le.s32.totalorder 2, %s11
      // Predicated region
      $region53: #{tpu_custom_call.1} parent=5 // pred_check
        %p370 = pneg %p369
      $region54: #{tpu_custom_call.1} parent=5 // pred_check_branch
        %372 = sbr.rel (%p370) target = $region56
      $region55: #{tpu_custom_call.1} parent=5 // pred_region
        %s373 = ssub.s32 %s11, 2
      $region56: #{tpu_custom_call.1} parent=5 // pred_fallthru
        _
    $region6: #{tpu_custom_call.1} parent=1 // loop_footer
      %s15 = sadd.s32 1, %s11
    $region7: #{tpu_custom_call.1} parent=1 // loop_footer_branch
      %10 = sbr.rel target = $region3
    $region8: #{tpu_custom_call.1} parent=1 // loop_exit
      _
    %374 = vsyncpa [#allocation5], 1
    %s375 = scalar_lea.sflag [#allocation5], 1
    %376 = vsyncpa %s375, 1

</llo_original>
